<compile_context>
chip_gen: v5e
topology: v5e:2x2
jax: 0.10.0
libtpu: 0.0.40
codegen_flags: <defaults>
</compile_context>

<pallas_src>
import functools
import math

import jax
import jax.numpy as jnp
from jax import lax
from jax.experimental import pallas as pl
from jax.experimental.pallas import tpu as pltpu


def _round_up(x: int, m: int) -> int:
    return ((x + m - 1) // m) * m


def _cdiv(a: int, b: int) -> int:
    return (a + b - 1) // b


# -------------------------------------------------------- hardware queries / capability probes

@functools.lru_cache(maxsize=None)
def _vmem_capacity_bytes() -> int:
    try:
        return int(pltpu.get_tpu_info().vmem_capacity_bytes)
    except Exception:
        return 64 * 1024 * 1024          # conservative default (v7x per-core VMEM)


@functools.lru_cache(maxsize=None)
def _single_buffer_supported() -> bool:
    """Probe once (eagerly, even if the wrapper is later jitted) whether
    BlockSpec(pipeline_mode=pl.Buffered(1)) lowers and runs correctly."""
    if not hasattr(pl, "Buffered"):
        return False

    def _k(x_ref, w_ref, o_ref):
        o_ref[...] = x_ref[...] + w_ref[...]

    try:
        x = jnp.arange(16 * 128, dtype=jnp.float32).reshape(16, 128)
        w = jnp.ones((8, 128), jnp.float32)
        out = pl.pallas_call(
            _k,
            out_shape=jax.ShapeDtypeStruct((16, 128), jnp.float32),
            grid=(2,),
            in_specs=[
                pl.BlockSpec((8, 128), lambda i: (i, 0)),
                pl.BlockSpec((8, 128), lambda i: (0, 0),
                             pipeline_mode=pl.Buffered(1)),   # grid-invariant input
            ],
            out_specs=pl.BlockSpec((8, 128), lambda i: (i, 0)),
        )(x, w)
        return bool(jnp.allclose(out, x + 1.0))
    except Exception:
        return False


# ------------------------------------------------------------------------------------- kernels

def _resident_kernel(x_ref, w_ref, b_ref, o_ref):
    # x (tm, H), w (V, H), b (1, V), o (tm, V); contraction over H (transposed RHS on the MXU).
    logits = lax.dot_general(
        x_ref[...], w_ref[...],
        dimension_numbers=(((1,), (1,)), ((), ())),
        preferred_element_type=jnp.float32) + b_ref[...]
    m = jnp.max(logits, axis=-1, keepdims=True)
    shifted = logits - m
    lse = jnp.log(jnp.sum(jnp.exp(shifted), axis=-1, keepdims=True))
    o_ref[...] = (shifted - lse).astype(o_ref.dtype)


def _stream_logits_row_kernel(x_ref, w_ref, b_ref, logits_ref, lse_ref, m_sc, l_sc):
    # grid = (row_tiles, vocab_tiles).  Writes unnormalized logits each step and, on the
    # last vocab tile, the per-row logsumexp.  Online max/sum kept in (tm, 1) f32 scratch.
    j = pl.program_id(1)
    nj = pl.num_programs(1)

    logits = lax.dot_general(
        x_ref[...], w_ref[...],
        dimension_numbers=(((1,), (1,)), ((), ())),
        preferred_element_type=jnp.float32) + b_ref[...]

    @pl.when(j == 0)
    def _():
        m_sc[...] = jnp.full_like(m_sc, -jnp.inf)
        l_sc[...] = jnp.zeros_like(l_sc)

    m_prev = m_sc[...]
    m_new = jnp.maximum(m_prev, jnp.max(logits, axis=-1, keepdims=True))
    # Rescale the running sum BEFORE adding this tile's partial sum.
    l_sc[...] = (l_sc[...] * jnp.exp(m_prev - m_new)
                 + jnp.sum(jnp.exp(logits - m_new), axis=-1, keepdims=True))
    m_sc[...] = m_new
    logits_ref[...] = logits.astype(logits_ref.dtype)

    @pl.when(j == nj - 1)
    def _():
        lse_ref[...] = m_sc[...] + jnp.log(l_sc[...])


def _stream_logits_vocab_kernel(x_ref, w_ref, b_ref, logits_ref, lse_ref, m_sc, l_sc):
    # grid = (vocab_tiles, row_tiles): W streams from HBM exactly once; the per-row online
    # stats live in a full (M_p, 1) f32 scratch sliced by the row-tile index.
    j = pl.program_id(0)
    i = pl.program_id(1)
    nj = pl.num_programs(0)
    tm = x_ref.shape[0]
    rows = pl.ds(pl.multiple_of(i * tm, 8), tm)

    logits = lax.dot_general(
        x_ref[...], w_ref[...],
        dimension_numbers=(((1,), (1,)), ((), ())),
        preferred_element_type=jnp.float32) + b_ref[...]

    @pl.when(j == 0)
    def _():
        m_sc[rows, :] = jnp.full((tm, 1), -jnp.inf, jnp.float32)
        l_sc[rows, :] = jnp.zeros((tm, 1), jnp.float32)

    m_prev = m_sc[rows, :]
    m_new = jnp.maximum(m_prev, jnp.max(logits, axis=-1, keepdims=True))
    l_sc[rows, :] = (l_sc[rows, :] * jnp.exp(m_prev - m_new)
                     + jnp.sum(jnp.exp(logits - m_new), axis=-1, keepdims=True))
    m_sc[rows, :] = m_new
    logits_ref[...] = logits.astype(logits_ref.dtype)

    @pl.when(j == nj - 1)
    def _():
        lse_ref[...] = m_sc[rows, :] + jnp.log(l_sc[rows, :])


def _normalize_kernel(logits_ref, lse_ref, o_ref):
    # Pure lane-dense subtract: log_probs = logits - lse (per row).
    o_ref[...] = (logits_ref[...].astype(jnp.float32) - lse_ref[...]).astype(o_ref.dtype)


# ------------------------------------------------------------------------- pallas_call drivers

def _run_resident(x2d, w_p, b2d, *, tm, out_dtype, single_buffer_w, vmem_limit):
    M_p, hidden_p = x2d.shape
    vocab_p = w_p.shape[0]
    num_i = M_p // tm
    csz = jnp.dtype(x2d.dtype).itemsize
    osz = jnp.dtype(out_dtype).itemsize
    # Grid-invariant weight / bias: single-buffer them so the largest VMEM buffer is not
    # duplicated by the pipeline (feature-probed; falls back to default double-buffering).
    w_kwargs = {"pipeline_mode": pl.Buffered(1)} if single_buffer_w else {}

    cost = pl.CostEstimate(
        flops=2 * M_p * hidden_p * vocab_p,
        transcendentals=M_p * vocab_p,
        bytes_accessed=int(M_p * hidden_p * csz + vocab_p * hidden_p * csz
                           + vocab_p * 4 + M_p * vocab_p * osz))

    return pl.pallas_call(
        _resident_kernel,
        out_shape=jax.ShapeDtypeStruct((M_p, vocab_p), out_dtype),
        grid_spec=pltpu.PrefetchScalarGridSpec(
            num_scalar_prefetch=0,
            grid=(num_i,),
            in_specs=[
                pl.BlockSpec((tm, hidden_p), lambda i: (i, 0)),
                pl.BlockSpec((vocab_p, hidden_p), lambda i: (0, 0), **w_kwargs),
                pl.BlockSpec((1, vocab_p), lambda i: (0, 0), **w_kwargs),
            ],
            out_specs=pl.BlockSpec((tm, vocab_p), lambda i: (i, 0)),
        ),
        compiler_params=pltpu.CompilerParams(
            dimension_semantics=("parallel",),
            vmem_limit_bytes=int(vmem_limit)),
        cost_estimate=cost,
    )(x2d, w_p, b2d)


def _run_streaming(x2d, w_p, b2d, *, tm, tn, out_dtype, order, vmem_limit):
    M_p, hidden_p = x2d.shape
    vocab_p = w_p.shape[0]
    num_i = M_p // tm
    num_j = vocab_p // tn
    csz = jnp.dtype(x2d.dtype).itemsize
    osz = jnp.dtype(out_dtype).itemsize

    if order == "vocab":
        grid = (num_j, num_i)
        kernel = _stream_logits_vocab_kernel
        in_specs = [pl.BlockSpec((tm, hidden_p), lambda j, i: (i, 0)),
                    pl.BlockSpec((tn, hidden_p), lambda j, i: (j, 0)),
                    pl.BlockSpec((1, tn), lambda j, i: (0, j))]
        out_specs = [pl.BlockSpec((tm, tn), lambda j, i: (i, j)),
                     pl.BlockSpec((tm, 1), lambda j, i: (i, 0))]
        scratch = [pltpu.VMEM((M_p, 1), jnp.float32),
                   pltpu.VMEM((M_p, 1), jnp.float32)]
        # Row axis is the inner (non-leading) grid axis here; keep both "arbitrary" and
        # rely on the normalize pass / resident path for megacore parallelism.
        dims = ("arbitrary", "arbitrary")
        w_reads = vocab_p * hidden_p * csz
        x_reads = num_j * M_p * hidden_p * csz
    else:
        grid = (num_i, num_j)
        kernel = _stream_logits_row_kernel
        in_specs = [pl.BlockSpec((tm, hidden_p), lambda i, j: (i, 0)),
                    pl.BlockSpec((tn, hidden_p), lambda i, j: (j, 0)),
                    pl.BlockSpec((1, tn), lambda i, j: (0, j))]
        out_specs = [pl.BlockSpec((tm, tn), lambda i, j: (i, j)),
                     pl.BlockSpec((tm, 1), lambda i, j: (i, 0))]
        scratch = [pltpu.VMEM((tm, 1), jnp.float32),
                   pltpu.VMEM((tm, 1), jnp.float32)]
        dims = ("parallel", "arbitrary")
        w_reads = num_i * vocab_p * hidden_p * csz
        x_reads = M_p * hidden_p * csz

    cost1 = pl.CostEstimate(
        flops=2 * M_p * hidden_p * vocab_p,
        transcendentals=M_p * vocab_p,
        bytes_accessed=int(x_reads + w_reads + M_p * vocab_p * osz + M_p * 4))

    logits, lse = pl.pallas_call(
        kernel,
        out_shape=(jax.ShapeDtypeStruct((M_p, vocab_p), out_dtype),
                   jax.ShapeDtypeStruct((M_p, 1), jnp.float32)),
        grid_spec=pltpu.PrefetchScalarGridSpec(
            num_scalar_prefetch=0, grid=grid,
            in_specs=in_specs, out_specs=out_specs, scratch_shapes=scratch),
        compiler_params=pltpu.CompilerParams(
            dimension_semantics=dims, vmem_limit_bytes=int(vmem_limit)),
        cost_estimate=cost1,
    )(x2d, w_p, b2d)

    cost2 = pl.CostEstimate(
        flops=M_p * vocab_p, transcendentals=0,
        bytes_accessed=int(2 * M_p * vocab_p * osz + num_j * M_p * 4))

    # Normalize pass: logits buffer is reused in place (no extra (M, V) HBM allocation).
    return pl.pallas_call(
        _normalize_kernel,
        out_shape=jax.ShapeDtypeStruct((M_p, vocab_p), out_dtype),
        grid_spec=pltpu.PrefetchScalarGridSpec(
            num_scalar_prefetch=0, grid=(num_i, num_j),
            in_specs=[pl.BlockSpec((tm, tn), lambda i, j: (i, j)),
                      pl.BlockSpec((tm, 1), lambda i, j: (i, 0))],
            out_specs=pl.BlockSpec((tm, tn), lambda i, j: (i, j))),
        compiler_params=pltpu.CompilerParams(
            dimension_semantics=("parallel", "parallel"),
            vmem_limit_bytes=int(vmem_limit)),
        input_output_aliases={0: 0},
        cost_estimate=cost2,
    )(logits, lse)


# ------------------------------------------------------------------------------------ wrapper

def _pad_operands(x2d, w, b_f32, M_p, hidden_p, vocab_p):
    M, hidden = x2d.shape
    vocab = w.shape[0]
    pad_h = hidden_p - hidden
    pad_v = vocab_p - vocab
    # TODO(synk): in a real model, pre-pad (and pre-cast) the weight once at load time so
    # these per-call pad copies of W disappear for unaligned hidden / vocab.
    if pad_h or pad_v:
        w = jnp.pad(w, ((0, pad_v), (0, pad_h)))
    if pad_h or (M_p != M):
        x2d = jnp.pad(x2d, ((0, M_p - M), (0, pad_h)))
    if pad_v:
        # Padded vocab rows get bias -1e30 -> exp underflows to exactly 0, so they never
        # contribute to the softmax normalization.
        b_f32 = jnp.pad(b_f32, (0, pad_v), constant_values=-1e30)
    return x2d, w, b_f32.reshape(1, vocab_p)


def masked_log_model(x, weight, bias, *, tm=None, tn=512, compute_dtype=None,
                     out_dtype=None, force_streaming=False, streaming_order="auto"):
    """Forward pass of MaskedLogModel: log_softmax(x @ weight.T + bias, axis=-1).

    x:      (..., hidden)
    weight: (vocab, hidden)   -- PyTorch nn.Linear layout (used as-is, no transpose)
    bias:   (vocab,)
    tm:     row tile (None -> generation-aware auto; rounded to a multiple of 8)
    tn:     vocab tile for the streaming path (multiple of 128; default 512 keeps the
            256x256 MXU on v6e/v7x fully fed)
    compute_dtype: e.g. jnp.bfloat16 on v6e/v7x; matmul accumulation and the softmax
            statistics stay f32.  For best performance store the weight in this dtype at
            parameter-load time so no per-call cast is paid.
    out_dtype: e.g. jnp.bfloat16 to halve the dominant (M, vocab) HBM writeback.
    """
    *batch_dims, hidden = x.shape
    vocab, hidden_w = weight.shape
    if hidden_w != hidden:
        raise ValueError("weight must be (vocab, hidden) with hidden == x.shape[-1]")
    M = int(math.prod(batch_dims)) if batch_dims else 1
    out_dtype = out_dtype if out_dtype is not None else x.dtype

    cd = (jnp.dtype(compute_dtype) if compute_dtype is not None
          else jnp.promote_types(x.dtype, weight.dtype))
    # NOTE: if weight.dtype != cd this cast is a full-weight HBM round trip per call;
    # pre-cast the parameter once at load time to avoid it.
    w = weight if weight.dtype == cd else weight.astype(cd)
    x2d = x.reshape(M, hidden)
    if x2d.dtype != cd:
        x2d = x2d.astype(cd)
    b_f32 = bias.astype(jnp.float32)

    csz = jnp.dtype(cd).itemsize
    osz = jnp.dtype(out_dtype).itemsize

    hidden_p = _round_up(hidden, 128)          # lane-dense x loads, full MXU K feed
    vocab_128 = _round_up(vocab, 128)

    # ---- generation-aware VMEM budgets --------------------------------------------
    vmem_cap = _vmem_capacity_bytes()
    # Leave headroom for Mosaic internal scratch (v7x's 64 MiB is the entire VMEM).
    vmem_limit = vmem_cap - ((16 << 20) if vmem_cap >= (96 << 20) else (12 << 20))
    resident_budget = vmem_limit - (12 << 20)

    single_buf = _single_buffer_supported()
    w_bufs = 1 if single_buf else 2

    # ---- weight-resident path: whole (vocab, hidden) weight lives in VMEM ----------
    tm_req = _round_up(tm, 8) if tm is not None else None
    tm_res = min(tm_req if tm_req is not None else 256, _round_up(M, 8))
    tm_res = max(8, _round_up(tm_res, 8))
    resident_bytes = (w_bufs * vocab_128 * hidden_p * csz      # resident weight
                      + 2 * tm_res * hidden_p * csz            # x tile (double buffered)
                      + 2 * tm_res * vocab_128 * osz           # out tile (double buffered)
                      + 2 * tm_res * vocab_128 * 4             # f32 logits/exp intermediates
                      + w_bufs * 8 * vocab_128 * 4)            # bias (1, V) -> (8, V) tiles

    if (not force_streaming) and resident_bytes + (2 << 20) <= resident_budget:
        vocab_p = vocab_128
        num_i = _cdiv(M, tm_res)
        M_p = num_i * tm_res
        x_p, w_p, b2d = _pad_operands(x2d, w, b_f32, M_p, hidden_p, vocab_p)
        out2d = _run_resident(x_p, w_p, b2d, tm=tm_res, out_dtype=out_dtype,
                              single_buffer_w=single_buf, vmem_limit=vmem_limit)
    else:
        # ---- vocab-streaming path ---------------------------------------------------
        tn_eff = max(128, min(_round_up(tn, 128), vocab_128))
        vocab_p = _round_up(vocab_128, tn_eff)
        num_j = vocab_p // tn_eff

        if tm_req is not None:
            tm_str = tm_req
        else:
            # Arithmetic intensity on the streamed weight ~ tm flops/byte: pick tm above
            # the compute/BW break-even (v6e ~680 -> 1024, v7x ~310 -> 512; v5e is
            # satisfied by either).  Distinguish generations via VMEM capacity.
            tm_str = 1024 if vmem_cap >= (96 << 20) else 512
        tm_str = max(8, min(_round_up(tm_str, 8), _round_up(M, 8)))

        def stream_bytes(tm_, stats_rows):
            return (2 * tm_ * hidden_p * csz          # x tile (double buffered)
                    + 2 * tn_eff * hidden_p * csz     # W tile (double buffered)
                    + 2 * tm_ * tn_eff * osz          # logits out tile (double buffered)
                    + 2 * tm_ * tn_eff * 4            # f32 logits intermediate
                    + 2 * tm_ * 128 * 4               # lse out tile (lane-padded)
                    + 2 * stats_rows * 128 * 4        # online stats scratch (lane-padded)
                    + 2 * 8 * tn_eff * 4)             # bias tile

        while tm_str > 256 and stream_bytes(tm_str, tm_str) + (2 << 20) > vmem_limit:
            tm_str = _round_up(tm_str // 2, 8)

        num_i = _cdiv(M, tm_str)
        M_p = num_i * tm_str

        if streaming_order == "auto":
            # vocab-major re-reads x (num_j-1) extra times; row-major re-reads W
            # (num_i-1) extra times.  Pick the cheaper order, provided the full-(M_p, 1)
            # stats scratch (lane-padded to 512 B/row) stays small.
            prefer_vocab = (num_i > 1 and num_j > 1
                            and (num_j - 1) * M_p < (num_i - 1) * vocab_p
                            and 2 * M_p * 128 * 4 <= (8 << 20)
                            and stream_bytes(tm_str, M_p) + (2 << 20) <= vmem_limit)
            order = "vocab" if prefer_vocab else "row"
        else:
            order = streaming_order

        x_p, w_p, b2d = _pad_operands(x2d, w, b_f32, M_p, hidden_p, vocab_p)
        out2d = _run_streaming(x_p, w_p, b2d, tm=tm_str, tn=tn_eff,
                               out_dtype=out_dtype, order=order, vmem_limit=vmem_limit)

    out2d = out2d[:M, :vocab]
    return out2d.reshape(*batch_dims, vocab)


# --------------------------------------------------------------------------------------- tests

if __name__ == "__main__":
    key = jax.random.PRNGKey(0)
    ks = jax.random.split(key, 6)

    # ---- primary shape: (batch, seq, hidden) -> (batch, seq, vocab), resident path ----
    batch, seq, hidden, vocab = 2, 8, 32, 128
    x = jax.random.normal(ks[0], (batch, seq, hidden), dtype=jnp.float32)
    weight = jax.random.normal(ks[1], (vocab, hidden), dtype=jnp.float32) * 0.05
    bias = jax.random.normal(ks[2], (vocab,), dtype=jnp.float32) * 0.05
    ref = jax.nn.log_softmax(x @ weight.T + bias, axis=-1)

    out = jax.block_until_ready(masked_log_model(x, weight, bias))
    assert out.shape == (batch, seq, vocab)
    assert jnp.allclose(out, ref, atol=1e-4, rtol=1e-4), "resident f32 path mismatch"

    # bf16 matmul inputs + bf16 output (v6e / v7x recommendation), looser tolerance
    out_bf16 = jax.block_until_ready(
        masked_log_model(x, weight, bias,
                         compute_dtype=jnp.bfloat16, out_dtype=jnp.bfloat16))
    assert out_bf16.dtype == jnp.bfloat16
    assert jnp.allclose(out_bf16.astype(jnp.float32), ref, atol=7.5e-2), "bf16 path mismatch"

    # ---- ragged shape: exercises M / hidden / vocab padding, multi-row-tile and
    # multi-vocab-tile grids, and both streaming traversal orders -----------------------
    x2 = jax.random.normal(ks[3], (4, 20, 48), dtype=jnp.float32)     # M = 80 rows
    w2 = jax.random.normal(ks[4], (200, 48), dtype=jnp.float32) * 0.05
    b2 = jax.random.normal(ks[5], (200,), dtype=jnp.float32) * 0.05
    ref2 = jax.nn.log_softmax(x2 @ w2.T + b2, axis=-1)

    out2_res = jax.block_until_ready(masked_log_model(x2, w2, b2, tm=32))
    assert jnp.allclose(out2_res, ref2, atol=1e-4, rtol=1e-4), "resident padded mismatch"

    out2_row = jax.block_until_ready(
        masked_log_model(x2, w2, b2, tm=32, tn=128, force_streaming=True,
                         streaming_order="row"))
    assert out2_row.shape == (4, 20, 200)
    assert jnp.allclose(out2_row, ref2, atol=1e-4, rtol=1e-4), "streaming (row) mismatch"

    out2_voc = jax.block_until_ready(
        masked_log_model(x2, w2, b2, tm=32, tn=128, force_streaming=True,
                         streaming_order="vocab"))
    assert jnp.allclose(out2_voc, ref2, atol=1e-4, rtol=1e-4), "streaming (vocab) mismatch"

    out2_auto = jax.block_until_ready(masked_log_model(x2, w2, b2, force_streaming=True))
    assert jnp.allclose(out2_auto, ref2, atol=1e-4, rtol=1e-4), "streaming (auto) mismatch"

    # TODO(synk): the PyTorch module's optional debug_file text logging has no kernel
    # equivalent and is intentionally omitted.
    print("KERNEL_OK")
</pallas_src>

<mosaic_0001>
module attributes {stable_mosaic.version = 11 : i64} {
  func.func @_k(%arg0: i32, %arg1: memref<8x128xf32, #tpu.memory_space<vmem>>, %arg2: memref<8x128xf32, #tpu.memory_space<vmem>>, %arg3: memref<8x128xf32, #tpu.memory_space<vmem>>) attributes {dimension_semantics = [#tpu.dimension_semantics<arbitrary>], iteration_bounds = array<i64: 2>, scalar_prefetch = 0 : i64, scratch_operands = 0 : i64, tpu.core_type = #tpu.core_type<tc>, window_params = [{transform_indices = @transform_0, window_bounds = array<i64: 8, 128>}, {pipeline_mode = #tpu.pipeline_mode<synchronous>, transform_indices = @transform_1, window_bounds = array<i64: 8, 128>}, {transform_indices = @transform_2, window_bounds = array<i64: 8, 128>}]} {
    %c0 = arith.constant 0 : index
    %c0_0 = arith.constant 0 : index
    %0 = vector.load %arg1[%c0, %c0_0] : memref<8x128xf32, #tpu.memory_space<vmem>>, vector<8x128xf32>
    %c0_1 = arith.constant 0 : index
    %c0_2 = arith.constant 0 : index
    %1 = vector.load %arg2[%c0_1, %c0_2] : memref<8x128xf32, #tpu.memory_space<vmem>>, vector<8x128xf32>
    %2 = arith.addf %0, %1 : vector<8x128xf32>
    %c0_3 = arith.constant 0 : index
    %c0_4 = arith.constant 0 : index
    %3 = vector.load %arg3[%c0_3, %c0_4] : memref<8x128xf32, #tpu.memory_space<vmem>>, vector<8x128xf32>
    tpu.vector_store %arg3[%c0_3, %c0_4], %2 {strides = array<i32>} : memref<8x128xf32, #tpu.memory_space<vmem>>, vector<8x128xf32>,
    return
  }
  func.func @transform_0(%arg0: i32) -> (i32, i32) {
    %c0_i32 = arith.constant 0 : i32
    %c0_i32_0 = arith.constant 0 : i32
    return %arg0, %c0_i32 : i32, i32
  }
  func.func @transform_1(%arg0: i32) -> (i32, i32) {
    %c0_i32 = arith.constant 0 : i32
    %c0_i32_0 = arith.constant 0 : i32
    %c0_i32_1 = arith.constant 0 : i32
    return %c0_i32, %c0_i32_0 : i32, i32
  }
  func.func @transform_2(%arg0: i32) -> (i32, i32) {
    %c0_i32 = arith.constant 0 : i32
    %c0_i32_0 = arith.constant 0 : i32
    return %arg0, %c0_i32 : i32, i32
  }
}

module attributes {stable_mosaic.version = 11 : i64} {
  func.func @_resident_kernel(%arg0: i32, %arg1: memref<16x128xf32, #tpu.memory_space<vmem>>, %arg2: memref<128x128xf32, #tpu.memory_space<vmem>>, %arg3: memref<1x128xf32, #tpu.memory_space<vmem>>, %arg4: memref<16x128xf32, #tpu.memory_space<vmem>>) attributes {dimension_semantics = [#tpu.dimension_semantics<parallel>], iteration_bounds = array<i64: 1>, scalar_prefetch = 0 : i64, scratch_operands = 0 : i64, tpu.core_type = #tpu.core_type<tc>, window_params = [{transform_indices = @transform_0, window_bounds = array<i64: 16, 128>}, {pipeline_mode = #tpu.pipeline_mode<synchronous>, transform_indices = @transform_1, window_bounds = array<i64: 128, 128>}, {pipeline_mode = #tpu.pipeline_mode<synchronous>, transform_indices = @transform_2, window_bounds = array<i64: 1, 128>}, {transform_indices = @transform_3, window_bounds = array<i64: 16, 128>}]} {
    %c0 = arith.constant 0 : index
    %c0_0 = arith.constant 0 : index
    %0 = vector.load %arg1[%c0, %c0_0] : memref<16x128xf32, #tpu.memory_space<vmem>>, vector<16x128xf32>
    %c0_1 = arith.constant 0 : index
    %c0_2 = arith.constant 0 : index
    %1 = vector.load %arg2[%c0_1, %c0_2] : memref<128x128xf32, #tpu.memory_space<vmem>>, vector<128x128xf32>
    %cst = arith.constant dense<0.000000e+00> : vector<16x128xf32>
    %2 = tpu.matmul %0, %1, %cst {dimension_numbers = #tpu.dot_dimension_numbers<[1], [1], [0], [0], [0, 0, 1, 0], [], []>} : vector<16x128xf32>, vector<128x128xf32>, vector<16x128xf32> -> vector<16x128xf32>
    %c0_3 = arith.constant 0 : index
    %c0_4 = arith.constant 0 : index
    %3 = vector.load %arg3[%c0_3, %c0_4] : memref<1x128xf32, #tpu.memory_space<vmem>>, vector<1x128xf32>
    %4 = vector.broadcast %3 : vector<1x128xf32> to vector<16x128xf32>
    %5 = arith.addf %2, %4 : vector<16x128xf32>
    %cst_5 = arith.constant dense<0xFF800000> : vector<16xf32>
    %6 = vector.multi_reduction <maximumf>, %5, %cst_5 [1] : vector<16x128xf32> to vector<16xf32>
    %7 = vector.shape_cast %6 : vector<16xf32> to vector<16x1xf32>
    %8 = vector.broadcast %7 : vector<16x1xf32> to vector<16x128xf32>
    %9 = arith.subf %5, %8 : vector<16x128xf32>
    %10 = math.exp %9 : vector<16x128xf32>
    %cst_6 = arith.constant dense<0.000000e+00> : vector<16xf32>
    %11 = vector.multi_reduction <add>, %10, %cst_6 [1] : vector<16x128xf32> to vector<16xf32>
    %12 = vector.shape_cast %11 : vector<16xf32> to vector<16x1xf32>
    %13 = math.log %12 : vector<16x1xf32>
    %14 = vector.broadcast %13 : vector<16x1xf32> to vector<16x128xf32>
    %15 = arith.subf %9, %14 : vector<16x128xf32>
    %c0_7 = arith.constant 0 : index
    %c0_8 = arith.constant 0 : index
    %16 = vector.load %arg4[%c0_7, %c0_8] : memref<16x128xf32, #tpu.memory_space<vmem>>, vector<16x128xf32>
    tpu.vector_store %arg4[%c0_7, %c0_8], %15 {strides = array<i32>} : memref<16x128xf32, #tpu.memory_space<vmem>>, vector<16x128xf32>,
    return
  }
  func.func @transform_0(%arg0: i32) -> (i32, i32) {
    %c0_i32 = arith.constant 0 : i32
    %c0_i32_0 = arith.constant 0 : i32
    return %arg0, %c0_i32 : i32, i32
  }
  func.func @transform_1(%arg0: i32) -> (i32, i32) {
    %c0_i32 = arith.constant 0 : i32
    %c0_i32_0 = arith.constant 0 : i32
    %c0_i32_1 = arith.constant 0 : i32
    return %c0_i32, %c0_i32_0 : i32, i32
  }
  func.func @transform_2(%arg0: i32) -> (i32, i32) {
    %c0_i32 = arith.constant 0 : i32
    %c0_i32_0 = arith.constant 0 : i32
    %c0_i32_1 = arith.constant 0 : i32
    return %c0_i32, %c0_i32_0 : i32, i32
  }
  func.func @transform_3(%arg0: i32) -> (i32, i32) {
    %c0_i32 = arith.constant 0 : i32
    %c0_i32_0 = arith.constant 0 : i32
    return %arg0, %c0_i32 : i32, i32
  }
}

</mosaic_0001>

<llo_original>
// kernel: tpu_custom_call.1
$region0: #{tpu_custom_call.1}
  #allocation0 [shape = 'u32[]', space=smem, size = 0x4, offset = 0x4, fixed_abs, tag = 'smem constant byte address 0x4 - core index']
  #allocation1 [shape = 'u32[72,128]{1,0:T(1,128)}', space=vmem, size = 0x9000, scoped, tag = 'internal scratch']
  %s0 = inlined_call_operand.hbm [shape: f32[16,128], index: 0, kind: input, shape index: {}]
  %s1 = inlined_call_operand.hbm [shape: f32[8,128], index: 1, kind: input, shape index: {}]
  %s2 = inlined_call_operand.hbm [shape: f32[16,128], index: 2, kind: output, shape index: {}]
  %s3 = sld [smem:[#allocation0]]
  $region49: #{tpu_custom_call.1} parent=0
    _
  %s5 = ssub.s32 1, %s3
  %s6 = scalar_select 0, %s5, %s3
  $region1: #{tpu_custom_call.1} parent=0
    #allocation2 [shape = 'u8[8192]{0}', space=vmem, size = 0x2000, scoped, tag = 'input window, operand 0']
    #allocation3 [shape = 's32[2]{0}', space=sflag, size = 0x8, scoped, tag = 'scoped memory for tpu_custom_call.1']
    #allocation4 [shape = 's32[2]{0}', space=sflag, size = 0x8, scoped, tag = 'scoped memory for tpu_custom_call.1']
    #allocation5 [shape = 'u8[4096]{0}', space=vmem, size = 0x1000, scoped, tag = 'input window, operand 1, single buffered']
    #allocation6 [shape = 's32[1]{0}', space=sflag, size = 0x4, scoped, tag = 'scoped memory for tpu_custom_call.1']
    #allocation7 [shape = 'u8[8192]{0}', space=vmem, size = 0x2000, scoped, tag = 'output window, operand 0']
    %7 = vsyncpa [#allocation3], 0
    %s8 = scalar_lea.sflag [#allocation3], 1
    %9 = vsyncpa %s8, 0
    %10 = vsyncpa [#allocation6], 0
    %11 = vsyncpa [#allocation4], 0
    %s12 = scalar_lea.sflag [#allocation4], 1
    %13 = vsyncpa %s12, 0
    loop: start=0, step=1, limit=4
    $region2: #{tpu_custom_call.1} parent=1 // loop_pre_header
      _
    $region3: #{tpu_custom_call.1} parent=1 // loop_header
      %s15 = sphi 0, %s19
      %p16 = scmp.ge.s32.totalorder %s15, 4
      %s25 = sphi 0, %s27
      %s28 = sphi 0, %s25
      %s29 = sphi 0, %s28
      %s45 = sphi 0, %s29
      %s49 = sphi 0, %s49
      %s51 = sphi 0, %s49
      %s52 = sphi 0, %s51
      %s66 = sphi 0, %s52
      %s72 = sphi 0, %s74
      %s75 = sphi 0, %s72
      %s76 = sphi 0, %s75
      %s92 = sphi 0, %s76
    $region4: #{tpu_custom_call.1} parent=1 // loop_header_branch
      %18 = sbr.rel (%p16) target = $region8
    $region5: #{tpu_custom_call.1} parent=1 // loop_body
      %s20 = ssub.s32 %s15, 1
      %s21 = ssub.s32 %s15, 2
      %s22 = sadd.s32 %s15, 1
      %s23 = ssub.s32 %s15, %s22
      %p24 = scmp.eq.s32.totalorder %s23, 0
      %s26 = sadd.s32 %s25, 1
      %s27 = scalar_select %p24, %s25, %s26
      %p30 = pneg %p24
      %p31 = scmp.eq.s32.totalorder %s15, 1
      %p32 = por %p30, %p31
      %p33 = scmp.ne.s32.totalorder %s25, %s28
      %p34 = scmp.eq.s32.totalorder %s15, 0
      %p35 = por %p33, %p34
      %p36 = scmp.ne.s32.totalorder %s25, %s28
      %p37 = scmp.eq.s32.totalorder %s20, 1
      %p38 = por %p36, %p37
      %p39 = scmp.ne.s32.totalorder %s28, %s29
      %p40 = scmp.eq.s32.totalorder %s20, 0
      %p41 = por %p39, %p40
      %p42 = scmp.ne.s32.totalorder %s28, %s29
      %p43 = scmp.eq.s32.totalorder %s21, 1
      %p44 = por %p42, %p43
      %p46 = scmp.ne.s32.totalorder %s29, %s45
      %p47 = scmp.eq.s32.totalorder %s21, 0
      %p48 = por %p46, %p47
      %s50 = sadd.s32 %s49, 1
      %p53 = scmp.eq.s32.totalorder %s15, 1
      %p54 = scmp.ne.s32.totalorder %s49, %s51
      %p55 = scmp.eq.s32.totalorder %s15, 0
      %p56 = por %p54, %p55
      %p57 = scmp.ne.s32.totalorder %s49, %s51
      %p58 = scmp.eq.s32.totalorder %s20, 1
      %p59 = por %p57, %p58
      %p60 = scmp.ne.s32.totalorder %s51, %s52
      %p61 = scmp.eq.s32.totalorder %s20, 0
      %p62 = por %p60, %p61
      %p63 = scmp.ne.s32.totalorder %s51, %s52
      %p64 = scmp.eq.s32.totalorder %s21, 1
      %p65 = por %p63, %p64
      %p67 = scmp.ne.s32.totalorder %s52, %s66
      %p68 = scmp.eq.s32.totalorder %s21, 0
      %p69 = por %p67, %p68
      %s70 = ssub.s32 %s15, %s22
      %p71 = scmp.eq.s32.totalorder %s70, 0
      %s73 = sadd.s32 %s72, 1
      %s74 = scalar_select %p71, %s72, %s73
      %p77 = pneg %p71
      %p78 = scmp.eq.s32.totalorder %s15, 1
      %p79 = por %p77, %p78
      %p80 = scmp.ne.s32.totalorder %s72, %s75
      %p81 = scmp.eq.s32.totalorder %s15, 0
      %p82 = por %p80, %p81
      %p83 = scmp.ne.s32.totalorder %s72, %s75
      %p84 = scmp.eq.s32.totalorder %s20, 1
      %p85 = por %p83, %p84
      %p86 = scmp.ne.s32.totalorder %s75, %s76
      %p87 = scmp.eq.s32.totalorder %s20, 0
      %p88 = por %p86, %p87
      %p89 = scmp.ne.s32.totalorder %s75, %s76
      %p90 = scmp.eq.s32.totalorder %s21, 1
      %p91 = por %p89, %p90
      %p93 = scmp.ne.s32.totalorder %s76, %s92
      %p94 = scmp.eq.s32.totalorder %s21, 0
      %p95 = por %p93, %p94
      %p96 = scmp.le.s32.totalorder 1, %s15
      %p97 = scmp.lt.s32.totalorder %s15, 3
      %p98 = pnand %p96, %p97
      %p99 = pneg %p98
      // Predicated region
      $region9: #{tpu_custom_call.1} parent=5 // pred_check
        _
      $region10: #{tpu_custom_call.1} parent=5 // pred_check_branch
        %101 = sbr.rel (%p98) target = $region12
      $region11: #{tpu_custom_call.1} parent=5 // pred_region
        %s102 = ssub.s32 %s15, 1
        // Predicated region
        $region13: #{tpu_custom_call.1} parent=11 // pred_check
          %p103 = pneg %p62
        $region14: #{tpu_custom_call.1} parent=11 // pred_check_branch
          %105 = sbr.rel (%p103) target = $region16
        $region15: #{tpu_custom_call.1} parent=11 // pred_region
          %107 = vsyncadd [#allocation6], 0
          %s109 = sshll.u32 %s1, 4
          %s110 = int_to_ptr.hbm [resolvable:$true] %s109
          %s111 = sshll.u32 [#allocation5], 4
          %s112 = int_to_ptr.vmem [resolvable:$true] %s111
          %114 = dma.hbm_to_vmem [thread:$0]  %s110, 128, %s112, [#allocation6]
        $region16: #{tpu_custom_call.1} parent=11 // pred_fallthru
          _
      $region12: #{tpu_custom_call.1} parent=5 // pred_fallthru
        _
      %p115 = scmp.lt.s32.totalorder %s15, 2
      // Predicated region
      $region17: #{tpu_custom_call.1} parent=5 // pred_check
        %p116 = pneg %p115
      $region18: #{tpu_custom_call.1} parent=5 // pred_check_branch
        %118 = sbr.rel (%p116) target = $region20
      $region19: #{tpu_custom_call.1} parent=5 // pred_region
        // Predicated region
        $region21: #{tpu_custom_call.1} parent=19 // pred_check
          %p119 = pneg %p35
        $region22: #{tpu_custom_call.1} parent=19 // pred_check_branch
          %121 = sbr.rel (%p119) target = $region24
        $region23: #{tpu_custom_call.1} parent=19 // pred_region
          %s122 = sand.u32 %s25, 1
          %s123 = scalar_lea.sflag [#allocation3], %s122
          %s124 = sand.u32 %s25, 1
          %s125 = smul.addr %s124, 8
          %s126 = scalar_lea.vmem [#allocation2], %s125
          %128 = vsyncadd %s123, 0
          %s129 = smul.addr %s15, 8
          %s130 = scalar_lea.hbm %s0, %s129
          %s132 = sshll.u32 %s130, 4
          %s133 = int_to_ptr.hbm [resolvable:$true] %s132
          %s134 = sshll.u32 %s126, 4
          %s135 = int_to_ptr.vmem [resolvable:$true] %s134
          %137 = dma.hbm_to_vmem [thread:$0]  %s133, 128, %s135, %s123
        $region24: #{tpu_custom_call.1} parent=19 // pred_fallthru
          _
      $region20: #{tpu_custom_call.1} parent=5 // pred_fallthru
        _
      %p138 = scmp.le.s32.totalorder 1, %s15
      %p139 = scmp.lt.s32.totalorder %s15, 3
      %p140 = pnand %p138, %p139
      %p141 = pneg %p140
      // Predicated region
      $region25: #{tpu_custom_call.1} parent=5 // pred_check
        _
      $region26: #{tpu_custom_call.1} parent=5 // pred_check_branch
        %143 = sbr.rel (%p140) target = $region28
      $region27: #{tpu_custom_call.1} parent=5 // pred_region
        %s144 = ssub.s32 %s15, 1
        %s145 = sand.u32 %s28, 1
        %s146 = scalar_lea.sflag [#allocation3], %s145
        %s147 = sand.u32 %s28, 1
        %s148 = smul.addr %s147, 8
        %s149 = scalar_lea.vmem [#allocation2], %s148
        // Predicated region
        $region29: #{tpu_custom_call.1} parent=27 // pred_check
          %p150 = pneg %p41
        $region30: #{tpu_custom_call.1} parent=27 // pred_check_branch
          %152 = sbr.rel (%p150) target = $region32
        $region31: #{tpu_custom_call.1} parent=27 // pred_region
          %154 = dma.done %s146, 128
        $region32: #{tpu_custom_call.1} parent=27 // pred_fallthru
          _
        // Predicated region
        $region33: #{tpu_custom_call.1} parent=27 // pred_check
          %p155 = pneg %p62
        $region34: #{tpu_custom_call.1} parent=27 // pred_check_branch
          %157 = sbr.rel (%p155) target = $region36
        $region35: #{tpu_custom_call.1} parent=27 // pred_region
          %159 = dma.done [#allocation6], 128
        $region36: #{tpu_custom_call.1} parent=27 // pred_fallthru
          _
        %s160 = sand.u32 %s28, 1
        %s161 = scalar_lea.sflag [#allocation3], %s160
        %s162 = sand.u32 %s28, 1
        %s163 = smul.addr %s162, 8
        %s164 = scalar_lea.vmem [#allocation2], %s163
        %p165 = pneg %p41
        %p166 = pneg %p38
        %p167 = pneg %p62
        %p168 = pneg %p59
        %p169 = pneg %p88
        %p170 = pneg %p85
        %s171 = sand.u32 %s75, 1
        %s172 = scalar_lea.sflag [#allocation4], %s171
        %s173 = sand.u32 %s75, 1
        %s174 = smul.addr %s173, 8
        %s175 = scalar_lea.vmem [#allocation7], %s174
        %v176 = vld [vmem:[%s149] sm:$0xff]
        %v177 = vld [vmem:[#allocation5] sm:$0xff]
        %v178 = vadd.f32 %v176, %v177
        %179 = vst [vmem:[%s175] sm:$0xff] %v178
        %s180 = sand.u32 %s75, 1
        %s181 = scalar_lea.sflag [#allocation4], %s180
        %s182 = sand.u32 %s75, 1
        %s183 = smul.addr %s182, 8
        %s184 = scalar_lea.vmem [#allocation7], %s183
        // Predicated region
        $region37: #{tpu_custom_call.1} parent=27 // pred_check
          %p185 = pneg %p85
        $region38: #{tpu_custom_call.1} parent=27 // pred_check_branch
          %187 = sbr.rel (%p185) target = $region40
        $region39: #{tpu_custom_call.1} parent=27 // pred_region
          %189 = vsyncadd %s181, 0
          %s190 = smul.addr %s20, 8
          %s191 = scalar_lea.hbm %s2, %s190
          %s193 = sshll.u32 %s184, 4
          %s194 = int_to_ptr.vmem [resolvable:$true] %s193
          %s195 = sshll.u32 %s191, 4
          %s196 = int_to_ptr.hbm [resolvable:$true] %s195
          %198 = dma.vmem_to_hbm [thread:$0]  %s194, 128, %s196, %s181
        $region40: #{tpu_custom_call.1} parent=27 // pred_fallthru
          _
      $region28: #{tpu_custom_call.1} parent=5 // pred_fallthru
        _
      %p199 = scmp.le.s32.totalorder 2, %s15
      // Predicated region
      $region41: #{tpu_custom_call.1} parent=5 // pred_check
        %p200 = pneg %p199
      $region42: #{tpu_custom_call.1} parent=5 // pred_check_branch
        %202 = sbr.rel (%p200) target = $region44
      $region43: #{tpu_custom_call.1} parent=5 // pred_region
        %s203 = ssub.s32 %s15, 2
        // Predicated region
        $region45: #{tpu_custom_call.1} parent=43 // pred_check
          %p204 = pneg %p91
        $region46: #{tpu_custom_call.1} parent=43 // pred_check_branch
          %206 = sbr.rel (%p204) target = $region48
        $region47: #{tpu_custom_call.1} parent=43 // pred_region
          %s207 = sand.u32 %s76, 1
          %s208 = scalar_lea.sflag [#allocation4], %s207
          %s209 = sand.u32 %s76, 1
          %s210 = smul.addr %s209, 8
          %s211 = scalar_lea.vmem [#allocation7], %s210
          %213 = dma.done %s208, 128
        $region48: #{tpu_custom_call.1} parent=43 // pred_fallthru
          _
      $region44: #{tpu_custom_call.1} parent=5 // pred_fallthru
        _
    $region6: #{tpu_custom_call.1} parent=1 // loop_footer
      %s19 = sadd.s32 1, %s15
    $region7: #{tpu_custom_call.1} parent=1 // loop_footer_branch
      %14 = sbr.rel target = $region3
    $region8: #{tpu_custom_call.1} parent=1 // loop_exit
      _
    %214 = vsyncpa [#allocation3], 1
    %s215 = scalar_lea.sflag [#allocation3], 1
    %216 = vsyncpa %s215, 1
    %217 = vsyncpa [#allocation6], 1
    %218 = vsyncpa [#allocation4], 1
    %s219 = scalar_lea.sflag [#allocation4], 1
    %220 = vsyncpa %s219, 1

// kernel: tpu_custom_call.1
$region0: #{tpu_custom_call.1}
  #allocation0 [shape = 'u32[]', space=smem, size = 0x4, offset = 0x4, fixed_abs, tag = 'smem constant byte address 0x4 - core index']
  #allocation1 [shape = 'u32[72,128]{1,0:T(1,128)}', space=vmem, size = 0x9000, scoped, tag = 'internal scratch']
  %s0 = inlined_call_operand.hbm [shape: f32[16,128], index: 0, kind: input, shape index: {}]
  %s1 = inlined_call_operand.hbm [shape: f32[128,128], index: 1, kind: input, shape index: {}]
  %s2 = inlined_call_operand.vmem [shape: f32[1,128], index: 2, kind: input, shape index: {}]
  %s3 = inlined_call_operand.hbm [shape: f32[16,128], index: 3, kind: output, shape index: {}]
  %s4 = sld [smem:[#allocation0]]
  $region30: #{tpu_custom_call.1} parent=0
    _
  %s6 = ssub.s32 1, %s4
  %s7 = scalar_select 0, %s6, %s4
  $region1: #{tpu_custom_call.1} parent=0
    #allocation2 [shape = 'u8[8192]{0}', space=vmem, size = 0x2000, scoped, tag = 'input window, operand 0, single buffered']
    #allocation3 [shape = 's32[1]{0}', space=sflag, size = 0x4, scoped, tag = 'scoped memory for tpu_custom_call.1']
    #allocation4 [shape = 's32[1]{0}', space=sflag, size = 0x4, scoped, tag = 'scoped memory for tpu_custom_call.1']
    #allocation5 [shape = 'u8[65536]{0}', space=vmem, size = 0x10000, scoped, tag = 'input window, operand 1, single buffered']
    #allocation6 [shape = 's32[1]{0}', space=sflag, size = 0x4, scoped, tag = 'scoped memory for tpu_custom_call.1']
    #allocation7 [shape = 'u8[8192]{0}', space=vmem, size = 0x2000, scoped, tag = 'output window, operand 0, single buffered']
    %8 = vsyncpa [#allocation3], 0
    %9 = vsyncpa [#allocation6], 0
    %10 = vsyncpa [#allocation4], 0
    // Predicated region
    $region2: #{tpu_custom_call.1} parent=1 // pred_check
      _
    $region3: #{tpu_custom_call.1} parent=1 // pred_check_branch
      %12 = sbr.rel (0) target = $region5
    $region4: #{tpu_custom_call.1} parent=1 // pred_region
      %14 = vsyncadd [#allocation3], 0
      %s15 = sshll.u32 %s0, 4
      %s16 = int_to_ptr.hbm [resolvable:$true] %s15
      %s17 = sshll.u32 [#allocation2], 4
      %s18 = int_to_ptr.vmem [resolvable:$true] %s17
      %23 = dma.hbm_to_vmem [thread:$0]  %s16, 256, %s18, [#allocation3], 128, 128, 8
    $region5: #{tpu_custom_call.1} parent=1 // pred_fallthru
      _
    // Predicated region
    $region6: #{tpu_custom_call.1} parent=1 // pred_check
      _
    $region7: #{tpu_custom_call.1} parent=1 // pred_check_branch
      %25 = sbr.rel (0) target = $region9
    $region8: #{tpu_custom_call.1} parent=1 // pred_region
      %27 = vsyncadd [#allocation6], 0
      %s28 = sshll.u32 %s1, 4
      %s29 = int_to_ptr.hbm [resolvable:$true] %s28
      %s30 = sshll.u32 [#allocation5], 4
      %s31 = int_to_ptr.vmem [resolvable:$true] %s30
      %36 = dma.hbm_to_vmem [thread:$0]  %s29, 2048, %s31, [#allocation6], 128, 128, 8
    $region9: #{tpu_custom_call.1} parent=1 // pred_fallthru
      _
    // Predicated region
    $region10: #{tpu_custom_call.1} parent=1 // pred_check
      _
    $region11: #{tpu_custom_call.1} parent=1 // pred_check_branch
      %38 = sbr.rel (0) target = $region13
    $region12: #{tpu_custom_call.1} parent=1 // pred_region
      _
    $region13: #{tpu_custom_call.1} parent=1 // pred_fallthru
      _
    // Predicated region
    $region14: #{tpu_custom_call.1} parent=1 // pred_check
      _
    $region15: #{tpu_custom_call.1} parent=1 // pred_check_branch
      %40 = sbr.rel (0) target = $region17
    $region16: #{tpu_custom_call.1} parent=1 // pred_region
      %42 = dma.done [#allocation3], 256
    $region17: #{tpu_custom_call.1} parent=1 // pred_fallthru
      _
    // Predicated region
    $region18: #{tpu_custom_call.1} parent=1 // pred_check
      _
    $region19: #{tpu_custom_call.1} parent=1 // pred_check_branch
      %44 = sbr.rel (0) target = $region21
    $region20: #{tpu_custom_call.1} parent=1 // pred_region
      %46 = dma.done [#allocation6], 2048
    $region21: #{tpu_custom_call.1} parent=1 // pred_fallthru
      _
    %v47 = vld [vmem:[#allocation2] sm:$0xff]
    %v48 = vld [vmem:[#allocation2 + $0x8] sm:$0xff]
    %v49 = vld [vmem:[#allocation5] sm:$0xff]
    %v50 = vld [vmem:[#allocation5 + $0x8] sm:$0xff]
    %v51 = vld [vmem:[#allocation5 + $0x10] sm:$0xff]
    %v52 = vld [vmem:[#allocation5 + $0x18] sm:$0xff]
    %v53 = vld [vmem:[#allocation5 + $0x20] sm:$0xff]
    %v54 = vld [vmem:[#allocation5 + $0x28] sm:$0xff]
    %v55 = vld [vmem:[#allocation5 + $0x30] sm:$0xff]
    %v56 = vld [vmem:[#allocation5 + $0x38] sm:$0xff]
    %v57 = vld [vmem:[#allocation5 + $0x40] sm:$0xff]
    %v58 = vld [vmem:[#allocation5 + $0x48] sm:$0xff]
    %v59 = vld [vmem:[#allocation5 + $0x50] sm:$0xff]
    %v60 = vld [vmem:[#allocation5 + $0x58] sm:$0xff]
    %v61 = vld [vmem:[#allocation5 + $0x60] sm:$0xff]
    %v62 = vld [vmem:[#allocation5 + $0x68] sm:$0xff]
    %v63 = vld [vmem:[#allocation5 + $0x70] sm:$0xff]
    %v64 = vld [vmem:[#allocation5 + $0x78] sm:$0xff]
    %v65 = vld [vmem:[%s2] sm:$0x1]
    %v67 = vperm.slane %v65, 0
    %69 = vmatpush.xpose.msra.mxu0 %v64
    %70 = vmatpush.xpose.msra.mxu0 %v63
    %71 = vmatpush.xpose.msra.mxu0 %v62
    %72 = vmatpush.xpose.msra.mxu0 %v61
    %73 = vmatpush.xpose.msra.mxu0 %v60
    %74 = vmatpush.xpose.msra.mxu0 %v59
    %75 = vmatpush.xpose.msra.mxu0 %v58
    %76 = vmatpush.xpose.msra.mxu0 %v57
    %77 = vmatpush.xpose.msra.mxu0 %v56
    %78 = vmatpush.xpose.msra.mxu0 %v55
    %79 = vmatpush.xpose.msra.mxu0 %v54
    %80 = vmatpush.xpose.msra.mxu0 %v53
    %81 = vmatpush.xpose.msra.mxu0 %v52
    %82 = vmatpush.xpose.msra.mxu0 %v51
    %83 = vmatpush.xpose.msra.mxu0 %v50
    %84 = vmatpush.xpose.msra.mxu0 %v49
    %85 = vmatmul.f32.gmra.mxu0 %v47
    %v86 = vpop.f32.mrf.mxu0
    %v87 = vadd.f32 %v67, %v86
    %88 = vmatmul.f32.gmra.mxu0 %v48
    %v89 = vpop.f32.mrf.mxu0
    %v90 = vadd.f32 %v67, %v89
    %91 = vdwg.mxu0
    %92 = vmax.xlane.f32.xlu0 %v87
    %v93 = vpop.xlane.xlu0 %92
    %94 = vmax.xlane.f32.xlu0 %v90
    %v95 = vpop.xlane.xlu0 %94
    %v96 = vsub.f32 %v87, %v93
    %v97 = vsub.f32 %v90, %v95
    %v98 = vmul.f32 %v96, 1.442695
    %v99 = vpow.pop %v98
    %v100 = vmul.f32 %v97, 1.442695
    %v101 = vpow.pop %v100
    %102 = vadd.xlane.f32.xlu0 %v99
    %v103 = vpop.xlane.xlu0 %102
    %104 = vadd.xlane.f32.xlu0 %v101
    %v105 = vpop.xlane.xlu0 %104
    %v106 = vlog2.pop %v103
    %v107 = vmul.f32 %v106, 0.6931472
    %v108 = vlog2.pop %v105
    %v109 = vmul.f32 %v108, 0.6931472
    %v110 = vsub.f32 %v96, %v107
    %v111 = vsub.f32 %v97, %v109
    %112 = vst [vmem:[#allocation7] sm:$0xff] %v110
    %113 = vst [vmem:[#allocation7 + $0x8] sm:$0xff] %v111
    // Predicated region
    $region22: #{tpu_custom_call.1} parent=1 // pred_check
      _
    $region23: #{tpu_custom_call.1} parent=1 // pred_check_branch
      %115 = sbr.rel (0) target = $region25
    $region24: #{tpu_custom_call.1} parent=1 // pred_region
      %117 = vsyncadd [#allocation4], 0
      %s118 = sshll.u32 [#allocation7], 4
      %s119 = int_to_ptr.vmem [resolvable:$true] %s118
      %s120 = sshll.u32 %s3, 4
      %s121 = int_to_ptr.hbm [resolvable:$true] %s120
      %126 = dma.vmem_to_hbm [thread:$0]  %s119, 256, %s121, [#allocation4], 128, 128, 8
    $region25: #{tpu_custom_call.1} parent=1 // pred_fallthru
      _
    // Predicated region
    $region26: #{tpu_custom_call.1} parent=1 // pred_check
      _
    $region27: #{tpu_custom_call.1} parent=1 // pred_check_branch
      %128 = sbr.rel (0) target = $region29
    $region28: #{tpu_custom_call.1} parent=1 // pred_region
      %130 = dma.done [#allocation4], 256
    $region29: #{tpu_custom_call.1} parent=1 // pred_fallthru
      _
    %131 = vsyncpa [#allocation3], 1
    %132 = vsyncpa [#allocation6], 1
    %133 = vsyncpa [#allocation4], 1

</llo_original>
